<compile_context>
chip_gen: v5e
topology: v5e:2x2
jax: 0.10.0
libtpu: 0.0.40
codegen_flags: <defaults>
</compile_context>

<pallas_src>
import jax
import jax.numpy as jnp
from jax.experimental import pallas as pl
from jax.experimental.pallas import tpu as pltpu


def _att_fusion_kernel(x_ref, wa_ref, pooled_ref, o_ref):
    # x_ref:      (1, C, THW) VMEM block (one batch element, one HW tile)
    # wa_ref:     (C, 2)      SMEM  (weights acting on x)
    # pooled_ref: (N, 2)      SMEM  (precomputed mean(x) @ Wb + bias, per batch)
    # o_ref:      (1, 2, THW) VMEM block (lane-dense output)
    n = pl.program_id(0)
    x = x_ref[0].astype(jnp.float32)              # (C, THW)
    C = x.shape[0]
    for o in range(2):                            # static unroll: 2 output channels
        acc = x[0:1, :] * wa_ref[0, o] + pooled_ref[n, o]
        for c in range(1, C):                     # static unroll: C broadcast-FMAs
            acc = acc + x[c:c + 1, :] * wa_ref[c, o]
        o_ref[0, o:o + 1, :] = jax.nn.sigmoid(acc).astype(o_ref.dtype)


def _pick_hw_tile(hw, target=8192):
    """Largest multiple-of-128 divisor of hw that is <= target (else the full hw)."""
    if hw <= target or hw % 128 != 0:
        return hw
    t = (target // 128) * 128
    while hw % t:
        t -= 128
    return t


def att_fusion_pallas(x_nchw, conv_w, conv_b):
    """x_nchw: (N, C, H, W); conv_w: (2, 2C, 1, 1); conv_b: (2,). Returns (N, 2, H, W)."""
    N, C, H, W = x_nchw.shape
    HW = H * W

    x_flat = x_nchw.reshape(N, C, HW)                          # free reshape, no transpose

    w2d = conv_w.reshape(2, 2 * C).astype(jnp.float32)         # (2, 2C)
    wa = w2d[:, :C].T                                          # (C, 2)  acts on x
    wb = w2d[:, C:].T                                          # (C, 2)  acts on pooled x
    # per-batch pooled term: mean(x) @ Wb + b  -> (N, 2), cheap XLA reduce
    x_mean = jnp.mean(x_flat.astype(jnp.float32), axis=2)      # (N, C)
    pooled = x_mean @ wb + conv_b.astype(jnp.float32)[None, :]  # (N, 2)

    thw = _pick_hw_tile(HW)
    grid = (N, HW // thw)

    out = pl.pallas_call(
        _att_fusion_kernel,
        out_shape=jax.ShapeDtypeStruct((N, 2, HW), x_nchw.dtype),
        grid=grid,
        in_specs=[
            pl.BlockSpec((1, C, thw), lambda n, t: (n, 0, t)),       # x tile (lane-dense)
            pl.BlockSpec(memory_space=pltpu.MemorySpace.SMEM),       # wa      (scalars)
            pl.BlockSpec(memory_space=pltpu.MemorySpace.SMEM),       # pooled  (scalars)
        ],
        out_specs=pl.BlockSpec((1, 2, thw), lambda n, t: (n, 0, t)),
        compiler_params=pltpu.CompilerParams(
            dimension_semantics=("parallel", "parallel")),
    )(x_flat, wa, pooled)

    return out.reshape(N, 2, H, W)                              # free reshape


def att_fusion_ref(x_nchw, conv_w, conv_b):
    N, C, H, W = x_nchw.shape
    x_pool = jnp.mean(x_nchw, axis=(2, 3), keepdims=True)             # (N, C, 1, 1)
    x_pool = jnp.broadcast_to(x_pool, (N, C, H, W))
    x_cat = jnp.concatenate([x_nchw, x_pool], axis=1)                 # (N, 2C, H, W)
    w2d = conv_w.reshape(2, 2 * C)                                    # (2, 2C)
    logits = jnp.einsum("nchw,oc->nohw", x_cat, w2d) + conv_b[None, :, None, None]
    return jax.nn.sigmoid(logits)


if __name__ == "__main__":
    key = jax.random.PRNGKey(0)
    N, C, H, W = 2, 4, 16, 16

    kx, kw, kb = jax.random.split(key, 3)
    x = jax.random.normal(kx, (N, C, H, W), dtype=jnp.float32)
    # deterministic synthetic parameters for Conv2d(2C, 2, kernel_size=1)
    conv_w = jax.random.normal(kw, (2, 2 * C, 1, 1), dtype=jnp.float32) * 0.1
    conv_b = jax.random.normal(kb, (2,), dtype=jnp.float32) * 0.1

    out = att_fusion_pallas(x, conv_w, conv_b)
    out = jax.block_until_ready(out)

    ref = att_fusion_ref(x, conv_w, conv_b)
    assert out.shape == (N, 2, H, W), out.shape
    assert jnp.allclose(out, ref, atol=1e-5, rtol=1e-5), float(jnp.max(jnp.abs(out - ref)))

    print("KERNEL_OK")
</pallas_src>

<mosaic_0001>
module attributes {stable_mosaic.version = 11 : i64} {
  func.func @_att_fusion_kernel(%arg0: i32, %arg1: i32, %arg2: memref<1x4x256xf32, #tpu.memory_space<vmem>>, %arg3: memref<4x2xf32, #tpu.memory_space<smem>>, %arg4: memref<2x2xf32, #tpu.memory_space<smem>>, %arg5: memref<1x2x256xf32, #tpu.memory_space<vmem>>) attributes {dimension_semantics = [#tpu.dimension_semantics<parallel>, #tpu.dimension_semantics<parallel>], iteration_bounds = array<i64: 2, 1>, scalar_prefetch = 0 : i64, scratch_operands = 0 : i64, tpu.core_type = #tpu.core_type<tc>, window_params = [{transform_indices = @transform_0, window_bounds = array<i64: 1, 4, 256>}, {transform_indices = @transform_1, window_bounds = array<i64: 4, 2>}, {transform_indices = @transform_2, window_bounds = array<i64: 2, 2>}, {transform_indices = @transform_3, window_bounds = array<i64: 1, 2, 256>}]} {
    %c0 = arith.constant 0 : index
    %c0_0 = arith.constant 0 : index
    %c0_1 = arith.constant 0 : index
    %0 = vector.load %arg2[%c0, %c0_0, %c0_1] : memref<1x4x256xf32, #tpu.memory_space<vmem>>, vector<1x4x256xf32>
    %1 = vector.shape_cast %0 : vector<1x4x256xf32> to vector<4x256xf32>
    %2 = vector.extract_strided_slice %1 {offsets = [0, 0], sizes = [1, 256], strides = [1, 1]} : vector<4x256xf32> to vector<1x256xf32>
    %c0_2 = arith.constant 0 : index
    %c0_3 = arith.constant 0 : index
    %3 = memref.load %arg3[%c0_2, %c0_3] : memref<4x2xf32, #tpu.memory_space<smem>>
    %4 = vector.broadcast %3 : f32 to vector<1x256xf32>
    %5 = arith.mulf %2, %4 : vector<1x256xf32>
    %6 = arith.index_cast %arg0 : i32 to index
    %c0_4 = arith.constant 0 : index
    %7 = memref.load %arg4[%6, %c0_4] : memref<2x2xf32, #tpu.memory_space<smem>>
    %8 = vector.broadcast %7 : f32 to vector<1x256xf32>
    %9 = arith.addf %5, %8 : vector<1x256xf32>
    %10 = vector.extract_strided_slice %1 {offsets = [1, 0], sizes = [1, 256], strides = [1, 1]} : vector<4x256xf32> to vector<1x256xf32>
    %c1 = arith.constant 1 : index
    %c0_5 = arith.constant 0 : index
    %11 = memref.load %arg3[%c1, %c0_5] : memref<4x2xf32, #tpu.memory_space<smem>>
    %12 = vector.broadcast %11 : f32 to vector<1x256xf32>
    %13 = arith.mulf %10, %12 : vector<1x256xf32>
    %14 = arith.addf %9, %13 : vector<1x256xf32>
    %15 = vector.extract_strided_slice %1 {offsets = [2, 0], sizes = [1, 256], strides = [1, 1]} : vector<4x256xf32> to vector<1x256xf32>
    %c2 = arith.constant 2 : index
    %c0_6 = arith.constant 0 : index
    %16 = memref.load %arg3[%c2, %c0_6] : memref<4x2xf32, #tpu.memory_space<smem>>
    %17 = vector.broadcast %16 : f32 to vector<1x256xf32>
    %18 = arith.mulf %15, %17 : vector<1x256xf32>
    %19 = arith.addf %14, %18 : vector<1x256xf32>
    %20 = vector.extract_strided_slice %1 {offsets = [3, 0], sizes = [1, 256], strides = [1, 1]} : vector<4x256xf32> to vector<1x256xf32>
    %c3 = arith.constant 3 : index
    %c0_7 = arith.constant 0 : index
    %21 = memref.load %arg3[%c3, %c0_7] : memref<4x2xf32, #tpu.memory_space<smem>>
    %22 = vector.broadcast %21 : f32 to vector<1x256xf32>
    %23 = arith.mulf %20, %22 : vector<1x256xf32>
    %24 = arith.addf %19, %23 : vector<1x256xf32>
    %25 = arith.negf %24 : vector<1x256xf32>
    %26 = math.exp %25 : vector<1x256xf32>
    %cst = arith.constant 1.000000e+00 : f32
    %27 = vector.broadcast %cst : f32 to vector<1x256xf32>
    %28 = arith.addf %27, %26 : vector<1x256xf32>
    %29 = arith.divf %27, %28 : vector<1x256xf32>
    %c0_8 = arith.constant 0 : index
    %c0_9 = arith.constant 0 : index
    %c0_10 = arith.constant 0 : index
    %30 = vector.load %arg5[%c0_8, %c0_9, %c0_10] : memref<1x2x256xf32, #tpu.memory_space<vmem>>, vector<1x1x256xf32>
    %31 = vector.shape_cast %30 : vector<1x1x256xf32> to vector<1x256xf32>
    %32 = vector.shape_cast %29 : vector<1x256xf32> to vector<1x1x256xf32>
    tpu.vector_store %arg5[%c0_8, %c0_9, %c0_10], %32 {strides = array<i32>} : memref<1x2x256xf32, #tpu.memory_space<vmem>>, vector<1x1x256xf32>,
    %33 = vector.extract_strided_slice %1 {offsets = [0, 0], sizes = [1, 256], strides = [1, 1]} : vector<4x256xf32> to vector<1x256xf32>
    %c0_11 = arith.constant 0 : index
    %c1_12 = arith.constant 1 : index
    %34 = memref.load %arg3[%c0_11, %c1_12] : memref<4x2xf32, #tpu.memory_space<smem>>
    %35 = vector.broadcast %34 : f32 to vector<1x256xf32>
    %36 = arith.mulf %33, %35 : vector<1x256xf32>
    %37 = arith.index_cast %arg0 : i32 to index
    %c1_13 = arith.constant 1 : index
    %38 = memref.load %arg4[%37, %c1_13] : memref<2x2xf32, #tpu.memory_space<smem>>
    %39 = vector.broadcast %38 : f32 to vector<1x256xf32>
    %40 = arith.addf %36, %39 : vector<1x256xf32>
    %41 = vector.extract_strided_slice %1 {offsets = [1, 0], sizes = [1, 256], strides = [1, 1]} : vector<4x256xf32> to vector<1x256xf32>
    %c1_14 = arith.constant 1 : index
    %c1_15 = arith.constant 1 : index
    %42 = memref.load %arg3[%c1_14, %c1_15] : memref<4x2xf32, #tpu.memory_space<smem>>
    %43 = vector.broadcast %42 : f32 to vector<1x256xf32>
    %44 = arith.mulf %41, %43 : vector<1x256xf32>
    %45 = arith.addf %40, %44 : vector<1x256xf32>
    %46 = vector.extract_strided_slice %1 {offsets = [2, 0], sizes = [1, 256], strides = [1, 1]} : vector<4x256xf32> to vector<1x256xf32>
    %c2_16 = arith.constant 2 : index
    %c1_17 = arith.constant 1 : index
    %47 = memref.load %arg3[%c2_16, %c1_17] : memref<4x2xf32, #tpu.memory_space<smem>>
    %48 = vector.broadcast %47 : f32 to vector<1x256xf32>
    %49 = arith.mulf %46, %48 : vector<1x256xf32>
    %50 = arith.addf %45, %49 : vector<1x256xf32>
    %51 = vector.extract_strided_slice %1 {offsets = [3, 0], sizes = [1, 256], strides = [1, 1]} : vector<4x256xf32> to vector<1x256xf32>
    %c3_18 = arith.constant 3 : index
    %c1_19 = arith.constant 1 : index
    %52 = memref.load %arg3[%c3_18, %c1_19] : memref<4x2xf32, #tpu.memory_space<smem>>
    %53 = vector.broadcast %52 : f32 to vector<1x256xf32>
    %54 = arith.mulf %51, %53 : vector<1x256xf32>
    %55 = arith.addf %50, %54 : vector<1x256xf32>
    %56 = arith.negf %55 : vector<1x256xf32>
    %57 = math.exp %56 : vector<1x256xf32>
    %cst_20 = arith.constant 1.000000e+00 : f32
    %58 = vector.broadcast %cst_20 : f32 to vector<1x256xf32>
    %59 = arith.addf %58, %57 : vector<1x256xf32>
    %60 = arith.divf %58, %59 : vector<1x256xf32>
    %c0_21 = arith.constant 0 : index
    %c1_22 = arith.constant 1 : index
    %c0_23 = arith.constant 0 : index
    %61 = vector.load %arg5[%c0_21, %c1_22, %c0_23] : memref<1x2x256xf32, #tpu.memory_space<vmem>>, vector<1x1x256xf32>
    %62 = vector.shape_cast %61 : vector<1x1x256xf32> to vector<1x256xf32>
    %63 = vector.shape_cast %60 : vector<1x256xf32> to vector<1x1x256xf32>
    tpu.vector_store %arg5[%c0_21, %c1_22, %c0_23], %63 {strides = array<i32>} : memref<1x2x256xf32, #tpu.memory_space<vmem>>, vector<1x1x256xf32>,
    return
  }
  func.func @transform_0(%arg0: i32, %arg1: i32) -> (i32, i32, i32) {
    %c0_i32 = arith.constant 0 : i32
    %c0_i32_0 = arith.constant 0 : i32
    return %arg0, %c0_i32, %arg1 : i32, i32, i32
  }
  func.func @transform_1(%arg0: i32, %arg1: i32) -> (i32, i32) {
    %c0_i32 = arith.constant 0 : i32
    %c0_i32_0 = arith.constant 0 : i32
    %c0_i32_1 = arith.constant 0 : i32
    return %c0_i32, %c0_i32_0 : i32, i32
  }
  func.func @transform_2(%arg0: i32, %arg1: i32) -> (i32, i32) {
    %c0_i32 = arith.constant 0 : i32
    %c0_i32_0 = arith.constant 0 : i32
    %c0_i32_1 = arith.constant 0 : i32
    return %c0_i32, %c0_i32_0 : i32, i32
  }
  func.func @transform_3(%arg0: i32, %arg1: i32) -> (i32, i32, i32) {
    %c0_i32 = arith.constant 0 : i32
    %c0_i32_0 = arith.constant 0 : i32
    return %arg0, %c0_i32, %arg1 : i32, i32, i32
  }
}

</mosaic_0001>

<llo_original>
// kernel: tpu_custom_call.1
$region0: #{tpu_custom_call.1}
  #allocation0 [shape = 'u32[]', space=smem, size = 0x4, offset = 0x4, fixed_abs, tag = 'smem constant byte address 0x4 - core index']
  #allocation1 [shape = 'u32[72,128]{1,0:T(1,128)}', space=vmem, size = 0x9000, scoped, tag = 'internal scratch']
  %s0 = inlined_call_operand.hbm [shape: f32[2,4,256], index: 0, kind: input, shape index: {}]
  %s1 = inlined_call_operand.vmem [shape: f32[4,2], index: 1, kind: input, shape index: {}]
  %s2 = inlined_call_operand.vmem [shape: f32[2,2], index: 2, kind: input, shape index: {}]
  %s3 = inlined_call_operand.hbm [shape: f32[2,2,256], index: 3, kind: output, shape index: {}]
  %s4 = sld [smem:[#allocation0]]
  $region57: #{tpu_custom_call.1} parent=0
    _
  %s6 = ssub.s32 1, %s4
  %s7 = scalar_select 0, %s6, %s4
  $region1: #{tpu_custom_call.1} parent=0
    #allocation2 [shape = 'u8[8192]{0}', space=vmem, size = 0x2000, scoped, tag = 'input window, operand 0']
    #allocation3 [shape = 's32[2]{0}', space=sflag, size = 0x8, scoped, tag = 'scoped memory for tpu_custom_call.1']
    #allocation4 [shape = 's32[2]{0}', space=sflag, size = 0x8, scoped, tag = 'scoped memory for tpu_custom_call.1']
    #allocation5 [shape = 's32[2]{0}', space=sflag, size = 0x8, scoped, tag = 'scoped memory for tpu_custom_call.1']
    #allocation6 [shape = 'u8[2048]{0}', space=smem, size = 0x800, scoped, tag = 'input window, operand 1, single buffered']
    #allocation7 [shape = 'u8[1024]{0}', space=smem, size = 0x400, scoped, tag = 'input window, operand 2, single buffered']
    #allocation8 [shape = 's32[1]{0}', space=sflag, size = 0x4, scoped, tag = 'scoped memory for tpu_custom_call.1']
    #allocation9 [shape = 'u8[4096]{0}', space=vmem, size = 0x1000, scoped, tag = 'output window, operand 0']
    %8 = vsyncpa [#allocation3], 0
    %s9 = scalar_lea.sflag [#allocation3], 1
    %10 = vsyncpa %s9, 0
    %11 = vsyncpa [#allocation5], 0
    %12 = vsyncpa [#allocation8], 0
    %13 = vsyncpa [#allocation4], 0
    %s14 = scalar_lea.sflag [#allocation4], 1
    %15 = vsyncpa %s14, 0
    loop: start=0, step=1, limit=4
    $region2: #{tpu_custom_call.1} parent=1 // loop_pre_header
      _
    $region3: #{tpu_custom_call.1} parent=1 // loop_header
      %s17 = sphi 0, %s21
      %p18 = scmp.ge.s32.totalorder %s17, 4
      %s24 = sphi 0, %s36
      %s25 = sphi 0, %s32
      %s26 = sphi 0, %s24
      %s27 = sphi 0, %s25
      %s28 = sphi 0, %s26
      %s29 = sphi 0, %s27
      %s41 = sphi 0, %s43
      %s44 = sphi 0, %s41
      %s45 = sphi 0, %s44
      %s61 = sphi 0, %s45
      %s65 = sphi 0, %s65
      %s67 = sphi 0, %s65
      %s68 = sphi 0, %s67
      %s82 = sphi 0, %s68
      %s86 = sphi 0, %s86
      %s88 = sphi 0, %s86
      %s89 = sphi 0, %s88
      %s103 = sphi 0, %s89
      %s111 = sphi 0, %s113
      %s114 = sphi 0, %s111
      %s115 = sphi 0, %s114
      %s131 = sphi 0, %s115
    $region4: #{tpu_custom_call.1} parent=1 // loop_header_branch
      %20 = sbr.rel (%p18) target = $region8
    $region5: #{tpu_custom_call.1} parent=1 // loop_body
      %s22 = ssub.s32 %s17, 1
      %s23 = ssub.s32 %s17, 2
      %s30 = sadd.s32 1, %s25
      %p31 = scmp.ge.s32.totalorder %s30, 1
      %s32 = scalar_select %p31, 0, %s30
      %s33 = sadd.s32 1, %s24
      %s34 = scalar_select %p31, %s33, %s24
      %p35 = scmp.ge.s32.totalorder %s34, 2
      %s36 = scalar_select %p35, 0, %s34
      %s37 = ssub.s32 %s24, %s36
      %s38 = ssub.s32 %s25, %s32
      %s39 = sor.u32 %s37, %s38
      %p40 = scmp.eq.s32.totalorder %s39, 0
      %s42 = sadd.s32 %s41, 1
      %s43 = scalar_select %p40, %s41, %s42
      %p46 = pneg %p40
      %p47 = scmp.eq.s32.totalorder %s17, 1
      %p48 = por %p46, %p47
      %p49 = scmp.ne.s32.totalorder %s41, %s44
      %p50 = scmp.eq.s32.totalorder %s17, 0
      %p51 = por %p49, %p50
      %p52 = scmp.ne.s32.totalorder %s41, %s44
      %p53 = scmp.eq.s32.totalorder %s22, 1
      %p54 = por %p52, %p53
      %p55 = scmp.ne.s32.totalorder %s44, %s45
      %p56 = scmp.eq.s32.totalorder %s22, 0
      %p57 = por %p55, %p56
      %p58 = scmp.ne.s32.totalorder %s44, %s45
      %p59 = scmp.eq.s32.totalorder %s23, 1
      %p60 = por %p58, %p59
      %p62 = scmp.ne.s32.totalorder %s45, %s61
      %p63 = scmp.eq.s32.totalorder %s23, 0
      %p64 = por %p62, %p63
      %s66 = sadd.s32 %s65, 1
      %p69 = scmp.eq.s32.totalorder %s17, 1
      %p70 = scmp.ne.s32.totalorder %s65, %s67
      %p71 = scmp.eq.s32.totalorder %s17, 0
      %p72 = por %p70, %p71
      %p73 = scmp.ne.s32.totalorder %s65, %s67
      %p74 = scmp.eq.s32.totalorder %s22, 1
      %p75 = por %p73, %p74
      %p76 = scmp.ne.s32.totalorder %s67, %s68
      %p77 = scmp.eq.s32.totalorder %s22, 0
      %p78 = por %p76, %p77
      %p79 = scmp.ne.s32.totalorder %s67, %s68
      %p80 = scmp.eq.s32.totalorder %s23, 1
      %p81 = por %p79, %p80
      %p83 = scmp.ne.s32.totalorder %s68, %s82
      %p84 = scmp.eq.s32.totalorder %s23, 0
      %p85 = por %p83, %p84
      %s87 = sadd.s32 %s86, 1
      %p90 = scmp.eq.s32.totalorder %s17, 1
      %p91 = scmp.ne.s32.totalorder %s86, %s88
      %p92 = scmp.eq.s32.totalorder %s17, 0
      %p93 = por %p91, %p92
      %p94 = scmp.ne.s32.totalorder %s86, %s88
      %p95 = scmp.eq.s32.totalorder %s22, 1
      %p96 = por %p94, %p95
      %p97 = scmp.ne.s32.totalorder %s88, %s89
      %p98 = scmp.eq.s32.totalorder %s22, 0
      %p99 = por %p97, %p98
      %p100 = scmp.ne.s32.totalorder %s88, %s89
      %p101 = scmp.eq.s32.totalorder %s23, 1
      %p102 = por %p100, %p101
      %p104 = scmp.ne.s32.totalorder %s89, %s103
      %p105 = scmp.eq.s32.totalorder %s23, 0
      %p106 = por %p104, %p105
      %s107 = ssub.s32 %s24, %s36
      %s108 = ssub.s32 %s25, %s32
      %s109 = sor.u32 %s107, %s108
      %p110 = scmp.eq.s32.totalorder %s109, 0
      %s112 = sadd.s32 %s111, 1
      %s113 = scalar_select %p110, %s111, %s112
      %p116 = pneg %p110
      %p117 = scmp.eq.s32.totalorder %s17, 1
      %p118 = por %p116, %p117
      %p119 = scmp.ne.s32.totalorder %s111, %s114
      %p120 = scmp.eq.s32.totalorder %s17, 0
      %p121 = por %p119, %p120
      %p122 = scmp.ne.s32.totalorder %s111, %s114
      %p123 = scmp.eq.s32.totalorder %s22, 1
      %p124 = por %p122, %p123
      %p125 = scmp.ne.s32.totalorder %s114, %s115
      %p126 = scmp.eq.s32.totalorder %s22, 0
      %p127 = por %p125, %p126
      %p128 = scmp.ne.s32.totalorder %s114, %s115
      %p129 = scmp.eq.s32.totalorder %s23, 1
      %p130 = por %p128, %p129
      %p132 = scmp.ne.s32.totalorder %s115, %s131
      %p133 = scmp.eq.s32.totalorder %s23, 0
      %p134 = por %p132, %p133
      %p135 = scmp.le.s32.totalorder 1, %s17
      %p136 = scmp.lt.s32.totalorder %s17, 3
      %p137 = pnand %p135, %p136
      %p138 = pneg %p137
      // Predicated region
      $region9: #{tpu_custom_call.1} parent=5 // pred_check
        _
      $region10: #{tpu_custom_call.1} parent=5 // pred_check_branch
        %140 = sbr.rel (%p137) target = $region12
      $region11: #{tpu_custom_call.1} parent=5 // pred_region
        %s141 = ssub.s32 %s17, 1
        // Predicated region
        $region13: #{tpu_custom_call.1} parent=11 // pred_check
          %p142 = pneg %p78
        $region14: #{tpu_custom_call.1} parent=11 // pred_check_branch
          %144 = sbr.rel (%p142) target = $region16
        $region15: #{tpu_custom_call.1} parent=11 // pred_region
          %146 = vsyncadd [#allocation5], 0
          %s148 = sshll.u32 %s1, 4
          %s149 = int_to_ptr.vmem [resolvable:$true] %s148
          %151 = dma.vmem_to_smem %s149, 64, [#allocation6], [#allocation5]
        $region16: #{tpu_custom_call.1} parent=11 // pred_fallthru
          _
        // Predicated region
        $region17: #{tpu_custom_call.1} parent=11 // pred_check
          %p152 = pneg %p99
        $region18: #{tpu_custom_call.1} parent=11 // pred_check_branch
          %154 = sbr.rel (%p152) target = $region20
        $region19: #{tpu_custom_call.1} parent=11 // pred_region
          %156 = vsyncadd [#allocation8], 0
          %s158 = sshll.u32 %s2, 4
          %s159 = int_to_ptr.vmem [resolvable:$true] %s158
          %161 = dma.vmem_to_smem %s159, 32, [#allocation7], [#allocation8]
        $region20: #{tpu_custom_call.1} parent=11 // pred_fallthru
          _
      $region12: #{tpu_custom_call.1} parent=5 // pred_fallthru
        _
      %p162 = scmp.lt.s32.totalorder %s17, 2
      // Predicated region
      $region21: #{tpu_custom_call.1} parent=5 // pred_check
        %p163 = pneg %p162
      $region22: #{tpu_custom_call.1} parent=5 // pred_check_branch
        %165 = sbr.rel (%p163) target = $region24
      $region23: #{tpu_custom_call.1} parent=5 // pred_region
        // Predicated region
        $region25: #{tpu_custom_call.1} parent=23 // pred_check
          %p166 = pneg %p51
        $region26: #{tpu_custom_call.1} parent=23 // pred_check_branch
          %168 = sbr.rel (%p166) target = $region28
        $region27: #{tpu_custom_call.1} parent=23 // pred_region
          %s169 = sand.u32 %s41, 1
          %s170 = scalar_lea.sflag [#allocation3], %s169
          %s171 = sand.u32 %s41, 1
          %s172 = smul.addr %s171, 8
          %s173 = scalar_lea.vmem [#allocation2], %s172
          %s174 = smul.u32 2, %s25
          %176 = vsyncadd %s170, 0
          %s177 = smul.addr %s24, 2
          %s178 = sadd.s32 %s174, %s177
          %s179 = smul.addr %s178, 4
          %s180 = scalar_lea.hbm %s0, %s179
          %s182 = sshll.u32 %s180, 4
          %s183 = int_to_ptr.hbm [resolvable:$true] %s182
          %s184 = sshll.u32 %s173, 4
          %s185 = int_to_ptr.vmem [resolvable:$true] %s184
          %187 = dma.hbm_to_vmem [thread:$0]  %s183, 128, %s185, %s170
        $region28: #{tpu_custom_call.1} parent=23 // pred_fallthru
          _
      $region24: #{tpu_custom_call.1} parent=5 // pred_fallthru
        _
      %p188 = scmp.le.s32.totalorder 1, %s17
      %p189 = scmp.lt.s32.totalorder %s17, 3
      %p190 = pnand %p188, %p189
      %p191 = pneg %p190
      // Predicated region
      $region29: #{tpu_custom_call.1} parent=5 // pred_check
        _
      $region30: #{tpu_custom_call.1} parent=5 // pred_check_branch
        %193 = sbr.rel (%p190) target = $region32
      $region31: #{tpu_custom_call.1} parent=5 // pred_region
        %s194 = ssub.s32 %s17, 1
        %s195 = sand.u32 %s44, 1
        %s196 = scalar_lea.sflag [#allocation3], %s195
        %s197 = sand.u32 %s44, 1
        %s198 = smul.addr %s197, 8
        %s199 = scalar_lea.vmem [#allocation2], %s198
        // Predicated region
        $region33: #{tpu_custom_call.1} parent=31 // pred_check
          %p200 = pneg %p57
        $region34: #{tpu_custom_call.1} parent=31 // pred_check_branch
          %202 = sbr.rel (%p200) target = $region36
        $region35: #{tpu_custom_call.1} parent=31 // pred_region
          %204 = dma.done %s196, 128
        $region36: #{tpu_custom_call.1} parent=31 // pred_fallthru
          _
        // Predicated region
        $region37: #{tpu_custom_call.1} parent=31 // pred_check
          %p205 = pneg %p78
        $region38: #{tpu_custom_call.1} parent=31 // pred_check_branch
          %207 = sbr.rel (%p205) target = $region40
        $region39: #{tpu_custom_call.1} parent=31 // pred_region
          %209 = dma.done [#allocation5], 64
        $region40: #{tpu_custom_call.1} parent=31 // pred_fallthru
          _
        // Predicated region
        $region41: #{tpu_custom_call.1} parent=31 // pred_check
          %p210 = pneg %p99
        $region42: #{tpu_custom_call.1} parent=31 // pred_check_branch
          %212 = sbr.rel (%p210) target = $region44
        $region43: #{tpu_custom_call.1} parent=31 // pred_region
          %214 = dma.done [#allocation8], 32
        $region44: #{tpu_custom_call.1} parent=31 // pred_fallthru
          _
        %215 = sfence
        %s216 = sand.u32 %s44, 1
        %s217 = scalar_lea.sflag [#allocation3], %s216
        %s218 = sand.u32 %s44, 1
        %s219 = smul.addr %s218, 8
        %s220 = scalar_lea.vmem [#allocation2], %s219
        %p221 = pneg %p57
        %p222 = pneg %p54
        %p223 = pneg %p78
        %p224 = pneg %p75
        %p225 = pneg %p99
        %p226 = pneg %p96
        %p227 = pneg %p127
        %p228 = pneg %p124
        %s229 = sand.u32 %s114, 1
        %s230 = scalar_lea.sflag [#allocation4], %s229
        %s231 = sand.u32 %s114, 1
        %s232 = smul.addr %s231, 4
        %s233 = scalar_lea.vmem [#allocation9], %s232
        %s234 = smul.u32 2, %s27
        %s235 = smul.u32 2, %s27
        %v236 = vld [vmem:[%s199] sm:$0xff]
        %s237 = sld [smem:[#allocation6]]
        %v238 = vstv %s237
        %v239 = vmul.f32 %v236, %v238
        %s240 = smul.u32 %s26, 128
        %s241 = sld [smem:[#allocation7 + %s240]]
        %v242 = vstv %s241
        %v243 = vadd.f32 %v239, %v242
        %s244 = sld [smem:[#allocation6 + $0x80]]
        %v245 = vstv %s244
        %v246 = vmul.f32 %v236, %v245
        %v248 = vrot.slane %v246, 5
        %v249 = vrot.slane %v248, 4
        %v251 = vadd.f32 %v243, %v249
        %s252 = sld [smem:[#allocation6 + $0x100]]
        %v253 = vstv %s252
        %v254 = vmul.f32 %v236, %v253
        %v256 = vrot.slane %v254, 6
        %v257 = vrot.slane %v256, 4
        %v259 = vadd.f32 %v251, %v257
        %s260 = sld [smem:[#allocation6 + $0x180]]
        %v261 = vstv %s260
        %v262 = vmul.f32 %v236, %v261
        %v264 = vrot.slane %v262, 7
        %v265 = vrot.slane %v264, 4
        %v267 = vadd.f32 %v259, %v265
        %v268 = vxor.u32 %v267, 2147483648
        %v269 = vmul.f32 %v268, 1.442695
        %v270 = vpow.pop %v269
        %v271 = vadd.f32 %v270, 1.0
        %v272 = vrcp.pop %v271
        %v273 = vmul.f32 %v271, %v272
        %v274 = vsub.f32 1.0, %v273
        %v275 = vmul.f32 %v272, %v274
        %v276 = vadd.f32 %v272, %v275
        %vm277 = vweird.f32 %v271
        %vm278 = vweird.f32 %v272
        %vm279 = vmor %vm277, %vm278
        %v280 = vsel %vm279, %v272, %v276
        %v281 = vand.u32 2147483647, %v271
        %vm282 = vcmp.eq.f32.partialorder %v281, 8.507059e+37
        %v283 = vand.u32 %v271, 2147483648
        %v284 = vor.u32 1.1754944e-38, %v283
        %v285 = vsel %vm282, %v284, %v280
        %v286 = vmul.f32 1.0, %v285
        %v288 = vrot.slane %v286, 3
        %vm289 = vcmask 1040384
        %v290 = vsel %vm289, %v286, %v288
        %v292 = vlaneseq
        %vm293 = vcmp.ge.s32.totalorder %v292, 0
        %vm294 = vcmp.lt.s32.totalorder %v292, 256
        %vm295 = vmand %vm293, %vm294
        %296 = vst.msk [vmem:[%s233] ss:$2 sm:$0x3] %vm295, %v290
        %s297 = sld [smem:[#allocation6 + $0x1]]
        %v298 = vstv %s297
        %v299 = vmul.f32 %v236, %v298
        %s300 = sadd.s32 %s240, 1
        %s301 = sld [smem:[#allocation7 + %s300]]
        %v302 = vstv %s301
        %v303 = vadd.f32 %v299, %v302
        %s304 = sld [smem:[#allocation6 + $0x81]]
        %v305 = vstv %s304
        %v306 = vmul.f32 %v236, %v305
        %v308 = vrot.slane %v306, 5
        %v309 = vrot.slane %v308, 4
        %v311 = vadd.f32 %v303, %v309
        %s312 = sld [smem:[#allocation6 + $0x101]]
        %v313 = vstv %s312
        %v314 = vmul.f32 %v236, %v313
        %v316 = vrot.slane %v314, 6
        %v317 = vrot.slane %v316, 4
        %v319 = vadd.f32 %v311, %v317
        %s320 = sld [smem:[#allocation6 + $0x181]]
        %v321 = vstv %s320
        %v322 = vmul.f32 %v236, %v321
        %v324 = vrot.slane %v322, 7
        %v325 = vrot.slane %v324, 4
        %v327 = vadd.f32 %v319, %v325
        %v328 = vxor.u32 %v327, 2147483648
        %v329 = vmul.f32 %v328, 1.442695
        %v330 = vpow.pop %v329
        %v331 = vadd.f32 %v330, 1.0
        %v332 = vrcp.pop %v331
        %v333 = vmul.f32 %v331, %v332
        %v334 = vsub.f32 1.0, %v333
        %v335 = vmul.f32 %v332, %v334
        %v336 = vadd.f32 %v332, %v335
        %vm337 = vweird.f32 %v331
        %vm338 = vweird.f32 %v332
        %vm339 = vmor %vm337, %vm338
        %v340 = vsel %vm339, %v332, %v336
        %v341 = vand.u32 2147483647, %v331
        %vm342 = vcmp.eq.f32.partialorder %v341, 8.507059e+37
        %v343 = vand.u32 %v331, 2147483648
        %v344 = vor.u32 1.1754944e-38, %v343
        %v345 = vsel %vm342, %v344, %v340
        %v346 = vmul.f32 1.0, %v345
        %v348 = vrot.slane %v346, 3
        %v349 = vsel %vm289, %v346, %v348
        %s351 = scalar_lea.vmem %s233, 1 [#allocation9]
        %352 = vst.msk [vmem:[%s351] ss:$2 sm:$0x3] %vm295, %v349
        %s353 = sand.u32 %s114, 1
        %s354 = scalar_lea.sflag [#allocation4], %s353
        %s355 = sand.u32 %s114, 1
        %s356 = smul.addr %s355, 4
        %s357 = scalar_lea.vmem [#allocation9], %s356
        // Predicated region
        $region45: #{tpu_custom_call.1} parent=31 // pred_check
          %p358 = pneg %p124
        $region46: #{tpu_custom_call.1} parent=31 // pred_check_branch
          %360 = sbr.rel (%p358) target = $region48
        $region47: #{tpu_custom_call.1} parent=31 // pred_region
          %s361 = smul.u32 2, %s27
          %363 = vsyncadd %s354, 0
          %s364 = smul.addr %s26, 2
          %s365 = sadd.s32 %s361, %s364
          %s366 = smul.addr %s365, 2
          %s367 = scalar_lea.hbm %s3, %s366
          %s369 = sshll.u32 %s357, 4
          %s370 = int_to_ptr.vmem [resolvable:$true] %s369
          %s371 = sshll.u32 %s367, 4
          %s372 = int_to_ptr.hbm [resolvable:$true] %s371
          %374 = dma.vmem_to_hbm [thread:$0]  %s370, 64, %s372, %s354
        $region48: #{tpu_custom_call.1} parent=31 // pred_fallthru
          _
      $region32: #{tpu_custom_call.1} parent=5 // pred_fallthru
        _
      %p375 = scmp.le.s32.totalorder 2, %s17
      // Predicated region
      $region49: #{tpu_custom_call.1} parent=5 // pred_check
        %p376 = pneg %p375
      $region50: #{tpu_custom_call.1} parent=5 // pred_check_branch
        %378 = sbr.rel (%p376) target = $region52
      $region51: #{tpu_custom_call.1} parent=5 // pred_region
        %s379 = ssub.s32 %s17, 2
        // Predicated region
        $region53: #{tpu_custom_call.1} parent=51 // pred_check
          %p380 = pneg %p130
        $region54: #{tpu_custom_call.1} parent=51 // pred_check_branch
          %382 = sbr.rel (%p380) target = $region56
        $region55: #{tpu_custom_call.1} parent=51 // pred_region
          %s383 = sand.u32 %s115, 1
          %s384 = scalar_lea.sflag [#allocation4], %s383
          %s385 = sand.u32 %s115, 1
          %s386 = smul.addr %s385, 4
          %s387 = scalar_lea.vmem [#allocation9], %s386
          %389 = dma.done %s384, 64
        $region56: #{tpu_custom_call.1} parent=51 // pred_fallthru
          _
      $region52: #{tpu_custom_call.1} parent=5 // pred_fallthru
        _
    $region6: #{tpu_custom_call.1} parent=1 // loop_footer
      %s21 = sadd.s32 1, %s17
    $region7: #{tpu_custom_call.1} parent=1 // loop_footer_branch
      %16 = sbr.rel target = $region3
    $region8: #{tpu_custom_call.1} parent=1 // loop_exit
      _
    %390 = vsyncpa [#allocation3], 1
    %s391 = scalar_lea.sflag [#allocation3], 1
    %392 = vsyncpa %s391, 1
    %393 = vsyncpa [#allocation4], 1
    %s394 = scalar_lea.sflag [#allocation4], 1
    %395 = vsyncpa %s394, 1
    %396 = vsyncpa [#allocation5], 1
    %s397 = scalar_lea.sflag [#allocation5], 1
    %398 = vsyncpa %s397, 1
    %399 = vsyncpa [#allocation8], 1

</llo_original>
